<compile_context>
chip_gen: v7x
topology: tpu7x:2x2x1
jax: 0.10.0
libtpu: 0.0.40
codegen_flags: <defaults>
</compile_context>

<pallas_src>
import functools

import jax
import jax.numpy as jnp
from jax.experimental import pallas as pl
from jax.experimental.pallas import tpu as pltpu


def se_attention_kernel(x_ref, w1t_ref, w2_ref, o_ref, *, inv_hw, use_mxu):
    # x_ref  : (Nb, C, HWp) VMEM block in the input dtype (lane-dense spatial axis).
    # w1t_ref: (C, Hd)      VMEM f32 -- fc1 weight transposed (W1.T).
    # w2_ref : (C, Hd)      VMEM f32 -- fc2 weight as stored by PyTorch (C, Hd).
    # o_ref  : (Nb, C, HWp) VMEM block in the input dtype.
    x = x_ref[...]                                    # single HBM->VMEM read of x
    xf = x.astype(jnp.float32)                        # in-register upcast only

    # --- squeeze: per-(b, c) spatial mean.  Sum over the (zero-padded) lane axis,
    # divided by the TRUE spatial size so lane padding never skews the mean.
    if use_mxu:
        # Production channel counts: route the two tiny FCs through the otherwise
        # idle MXU; avoids the (Nb, C, Hd) broadcast intermediate.
        avg2 = jnp.sum(xf, axis=2) * inv_hw           # (Nb, C)
        y1 = jnp.maximum(
            jax.lax.dot_general(avg2, w1t_ref[...], (((1,), (0,)), ((), ())),
                                preferred_element_type=jnp.float32), 0.0)   # (Nb, Hd)
        y2 = jax.lax.dot_general(y1, w2_ref[...], (((1,), (1,)), ((), ())),
                                 preferred_element_type=jnp.float32)        # (Nb, C)
        # sigmoid in f32: exp -> EUP slot; exact reciprocal is free at this size.
        scale = pl.reciprocal(1.0 + jnp.exp(-y2))[:, :, None]               # (Nb, C, 1)
    else:
        # Tiny-C path (demo C=4): broadcast-multiply + sublane/lane reductions,
        # far too small to fill the MXU and avoids any tiny-matmul padding.
        avg = jnp.sum(xf, axis=2, keepdims=True) * inv_hw                   # (Nb, C, 1)
        w1t = w1t_ref[...][None, :, :]                                      # (1, C, Hd)
        y1 = jnp.maximum(jnp.sum(avg * w1t, axis=1, keepdims=True), 0.0)    # (Nb, 1, Hd)
        w2 = w2_ref[...][None, :, :]                                        # (1, C, Hd)
        y2 = jnp.sum(y1 * w2, axis=2, keepdims=True)                        # (Nb, C, 1)
        scale = pl.reciprocal(1.0 + jnp.exp(-y2))                           # (Nb, C, 1)

    # --- scale: broadcast the per-channel gate over the lane-dense spatial axis,
    # write back in the input dtype (no forced f32 output).
    o_ref[...] = (xf * scale).astype(o_ref.dtype)


def _tpu_vmem_and_cores():
    """Best-effort hardware query; conservative fallbacks (v7x: 64 MiB, 2 TCs)."""
    vmem_bytes = 64 * 1024 * 1024
    num_cores = 2
    try:
        info = pltpu.get_tpu_info()
        vmem_bytes = int(getattr(info, "vmem_capacity_bytes", vmem_bytes))
        for name in ("num_cores", "tensorcores_per_chip", "num_tensorcores",
                     "core_count"):
            v = getattr(info, name, None)
            if v:
                num_cores = int(v)
                break
    except Exception:
        pass
    return vmem_bytes, num_cores


def _choose_block(N, C, HW_pad, itemsize):
    """Pick batch rows per block and the matching vmem_limit_bytes."""
    vmem_bytes, num_cores = _tpu_vmem_and_cores()
    # 2x(in) + 2x(out) double-buffered blocks must stay well under per-TC VMEM:
    # ~64 MiB limit on v5e/v6e (128 MiB physical), ~48 MiB on v7x (64 MiB physical).
    vmem_limit = min(vmem_bytes * 3 // 4, 64 * 1024 * 1024)
    max_block_bytes = max(1, vmem_limit // 5)          # 4 live block buffers + slack

    # VMEM pads the sublane (C) axis; account for it so small-C configs don't
    # silently overshoot the budget.
    sublane = max(8, 32 // max(1, itemsize))           # 8 for f32, 16 for bf16
    c_pad = ((C + sublane - 1) // sublane) * sublane
    per_batch_bytes = max(1, c_pad * HW_pad * itemsize)

    bn = max(1, max_block_bytes // per_batch_bytes)
    if num_cores > 1 and N > 1:
        # Megacore (v7x): aim for >= 4 pipelined steps per TensorCore so both
        # cores reach steady state, but never shrink blocks below ~2 MiB
        # (measured ~85%+ of HBM roofline already at that size).
        min_bn = max(1, (2 * 1024 * 1024) // per_batch_bytes)
        bn_for_steps = max(1, -(-N // (4 * num_cores)))    # ceil-div
        bn = min(bn, max(bn_for_steps, min_bn))
    # Single-TC parts (v5e/v6e): no artificial splitting -- largest block wins.
    return int(min(bn, N)), int(vmem_limit)


def se_attention(x, w1, w2, *, block_n=None):
    """SEAttention forward.

    x : (N, C, H, W)  input feature map (f32 / bf16 / fp16 -- dtype preserved)
    w1: (hidden, C)   fc1 weight (PyTorch Linear layout, no bias)
    w2: (C, hidden)   fc2 weight (PyTorch Linear layout, no bias)
    returns (N, C, H, W) in x.dtype
    """
    N, C, H, W = x.shape
    hidden = w1.shape[0]
    assert w1.shape == (hidden, C) and w2.shape == (C, hidden)

    HW = H * W
    HW_pad = ((HW + 127) // 128) * 128                 # lane-dense minor axis

    x_flat = x.reshape(N, C, HW)
    if HW_pad != HW:
        # TODO(synk): guarantee lane-dense spatial sizes at the model/layout level;
        # the zero-pad here costs one extra HBM pass for odd HW (e.g. 7x7, 14x14).
        x_flat = jnp.pad(x_flat, ((0, 0), (0, 0), (0, HW_pad - HW)))

    # The tiny FC weights stay f32 regardless of x dtype (the gate math must be f32).
    w1t = jnp.asarray(w1, jnp.float32).T               # (C, hidden)
    w2c = jnp.asarray(w2, jnp.float32)                 # (C, hidden)

    itemsize = jnp.dtype(x.dtype).itemsize
    auto_bn, vmem_limit = _choose_block(N, C, HW_pad, itemsize)
    if block_n is None:
        block_n = auto_bn
    grid_n = pl.cdiv(N, block_n)
    # NOTE: if N % block_n != 0 the last block's padded batch rows read garbage and
    # their output rows are dropped by Pallas; rows are independent (no cross-row
    # reduction), so this is safe.

    # Use the MXU for the excitation only at production channel counts; for tiny C
    # the VPU/XLU path is cheaper and avoids relayouts.
    use_mxu = (C >= 128) and (hidden >= 8)

    kernel = functools.partial(se_attention_kernel,
                               inv_hw=1.0 / float(HW), use_mxu=use_mxu)

    out_flat = pl.pallas_call(
        kernel,
        out_shape=jax.ShapeDtypeStruct((N, C, HW_pad), x.dtype),
        grid_spec=pltpu.PrefetchScalarGridSpec(
            num_scalar_prefetch=0,
            grid=(grid_n,),
            in_specs=[
                pl.BlockSpec((block_n, C, HW_pad), lambda n: (n, 0, 0)),
                pl.BlockSpec((C, hidden), lambda n: (0, 0)),
                pl.BlockSpec((C, hidden), lambda n: (0, 0)),
            ],
            out_specs=pl.BlockSpec((block_n, C, HW_pad), lambda n: (n, 0, 0)),
        ),
        compiler_params=pltpu.CompilerParams(
            dimension_semantics=("parallel",),
            vmem_limit_bytes=int(vmem_limit),
        ),
    )(x_flat, w1t, w2c)

    return out_flat[..., :HW].reshape(N, C, H, W)


if __name__ == "__main__":
    key = jax.random.PRNGKey(0)
    kx, k1, k2 = jax.random.split(key, 3)

    # Small shapes consistent with the module's forward.
    N, C, H, W = 2, 4, 16, 16
    reduction = 2
    hidden = C // reduction

    x = jax.random.normal(kx, (N, C, H, W), dtype=jnp.float32)

    # Deterministic PyTorch-Linear-like init (kaiming-uniform bounds, no bias).
    b1 = 1.0 / (C ** 0.5)
    w1 = jax.random.uniform(k1, (hidden, C), jnp.float32, -b1, b1)
    b2 = 1.0 / (hidden ** 0.5)
    w2 = jax.random.uniform(k2, (C, hidden), jnp.float32, -b2, b2)

    def reference(xx):
        xf = xx.astype(jnp.float32)
        y = jnp.mean(xf, axis=(2, 3))                  # (N, C)
        y = jnp.maximum(y @ w1.T, 0.0)                 # (N, hidden)
        y = jax.nn.sigmoid(y @ w2.T)                   # (N, C)
        return xf * y[:, :, None, None]

    # float32 path (exact).
    out = jax.block_until_ready(se_attention(x, w1, w2))
    assert out.shape == (N, C, H, W) and out.dtype == x.dtype
    err = float(jnp.max(jnp.abs(out - reference(x))))
    assert jnp.allclose(out, reference(x), atol=1e-5), err

    # bf16 native-dtype I/O path (kernel keeps the gate math in f32 in-register,
    # output comes back as bf16 -- the key bandwidth optimization).
    x_bf = x.astype(jnp.bfloat16)
    out_bf = jax.block_until_ready(se_attention(x_bf, w1, w2))
    assert out_bf.shape == (N, C, H, W) and out_bf.dtype == jnp.bfloat16
    err_bf = float(jnp.max(jnp.abs(out_bf.astype(jnp.float32) - reference(x_bf))))
    assert jnp.allclose(out_bf.astype(jnp.float32), reference(x_bf), atol=5e-2), err_bf

    print("KERNEL_OK")
</pallas_src>

<mosaic_0001>
module attributes {stable_mosaic.version = 11 : i64} {
  func.func @se_attention_kernel(%arg0: i32, %arg1: memref<2x4x256xf32, #tpu.memory_space<vmem>>, %arg2: memref<4x2xf32, #tpu.memory_space<vmem>>, %arg3: memref<4x2xf32, #tpu.memory_space<vmem>>, %arg4: memref<2x4x256xf32, #tpu.memory_space<vmem>>) attributes {dimension_semantics = [#tpu.dimension_semantics<parallel>], iteration_bounds = array<i64: 1>, scalar_prefetch = 0 : i64, scratch_operands = 0 : i64, tpu.core_type = #tpu.core_type<tc>, window_params = [{transform_indices = @transform_0, window_bounds = array<i64: 2, 4, 256>}, {pipeline_mode = #tpu.pipeline_mode<synchronous>, transform_indices = @transform_1, window_bounds = array<i64: 4, 2>}, {pipeline_mode = #tpu.pipeline_mode<synchronous>, transform_indices = @transform_2, window_bounds = array<i64: 4, 2>}, {transform_indices = @transform_3, window_bounds = array<i64: 2, 4, 256>}]} {
    %c0 = arith.constant 0 : index
    %c0_0 = arith.constant 0 : index
    %c0_1 = arith.constant 0 : index
    %0 = vector.load %arg1[%c0, %c0_0, %c0_1] : memref<2x4x256xf32, #tpu.memory_space<vmem>>, vector<2x4x256xf32>
    %cst = arith.constant dense<0.000000e+00> : vector<2x4xf32>
    %1 = vector.multi_reduction <add>, %0, %cst [2] : vector<2x4x256xf32> to vector<2x4xf32>
    %2 = vector.shape_cast %1 : vector<2x4xf32> to vector<2x4x1xf32>
    %cst_2 = arith.constant 3.906250e-03 : f32
    %3 = vector.broadcast %cst_2 : f32 to vector<2x4x1xf32>
    %4 = arith.mulf %2, %3 : vector<2x4x1xf32>
    %c0_3 = arith.constant 0 : index
    %c0_4 = arith.constant 0 : index
    %5 = vector.load %arg2[%c0_3, %c0_4] : memref<4x2xf32, #tpu.memory_space<vmem>>, vector<4x2xf32>
    %6 = vector.shape_cast %5 : vector<4x2xf32> to vector<1x4x2xf32>
    %7 = vector.broadcast %4 : vector<2x4x1xf32> to vector<2x4x2xf32>
    %8 = vector.broadcast %6 : vector<1x4x2xf32> to vector<2x4x2xf32>
    %9 = arith.mulf %7, %8 : vector<2x4x2xf32>
    %cst_5 = arith.constant dense<0.000000e+00> : vector<2x2xf32>
    %10 = vector.multi_reduction <add>, %9, %cst_5 [1] : vector<2x4x2xf32> to vector<2x2xf32>
    %11 = vector.shape_cast %10 : vector<2x2xf32> to vector<2x1x2xf32>
    %cst_6 = arith.constant 0.000000e+00 : f32
    %12 = vector.broadcast %cst_6 : f32 to vector<2x1x2xf32>
    %13 = arith.maximumf %11, %12 : vector<2x1x2xf32>
    %c0_7 = arith.constant 0 : index
    %c0_8 = arith.constant 0 : index
    %14 = vector.load %arg3[%c0_7, %c0_8] : memref<4x2xf32, #tpu.memory_space<vmem>>, vector<4x2xf32>
    %15 = vector.shape_cast %14 : vector<4x2xf32> to vector<1x4x2xf32>
    %16 = vector.broadcast %13 : vector<2x1x2xf32> to vector<2x4x2xf32>
    %17 = vector.broadcast %15 : vector<1x4x2xf32> to vector<2x4x2xf32>
    %18 = arith.mulf %16, %17 : vector<2x4x2xf32>
    %cst_9 = arith.constant dense<0.000000e+00> : vector<2x4xf32>
    %19 = vector.multi_reduction <add>, %18, %cst_9 [2] : vector<2x4x2xf32> to vector<2x4xf32>
    %20 = vector.shape_cast %19 : vector<2x4xf32> to vector<2x4x1xf32>
    %cst_10 = arith.constant 0.000000e+00 : f32
    %21 = vector.broadcast %cst_10 : f32 to vector<2x4x1xf32>
    %22 = arith.subf %21, %20 : vector<2x4x1xf32>
    %23 = math.exp %22 : vector<2x4x1xf32>
    %cst_11 = arith.constant 1.000000e+00 : f32
    %24 = vector.broadcast %cst_11 : f32 to vector<2x4x1xf32>
    %25 = arith.addf %24, %23 : vector<2x4x1xf32>
    %26 = tpu.reciprocal %25 : vector<2x4x1xf32> -> vector<2x4x1xf32>
    %27 = vector.broadcast %26 : vector<2x4x1xf32> to vector<2x4x256xf32>
    %28 = arith.mulf %0, %27 : vector<2x4x256xf32>
    %c0_12 = arith.constant 0 : index
    %c0_13 = arith.constant 0 : index
    %c0_14 = arith.constant 0 : index
    %29 = vector.load %arg4[%c0_12, %c0_13, %c0_14] : memref<2x4x256xf32, #tpu.memory_space<vmem>>, vector<2x4x256xf32>
    tpu.vector_store %arg4[%c0_12, %c0_13, %c0_14], %28 {strides = array<i32>} : memref<2x4x256xf32, #tpu.memory_space<vmem>>, vector<2x4x256xf32>,
    return
  }
  func.func @transform_0(%arg0: i32) -> (i32, i32, i32) {
    %c0_i32 = arith.constant 0 : i32
    %c0_i32_0 = arith.constant 0 : i32
    %c0_i32_1 = arith.constant 0 : i32
    return %arg0, %c0_i32, %c0_i32_0 : i32, i32, i32
  }
  func.func @transform_1(%arg0: i32) -> (i32, i32) {
    %c0_i32 = arith.constant 0 : i32
    %c0_i32_0 = arith.constant 0 : i32
    %c0_i32_1 = arith.constant 0 : i32
    return %c0_i32, %c0_i32_0 : i32, i32
  }
  func.func @transform_2(%arg0: i32) -> (i32, i32) {
    %c0_i32 = arith.constant 0 : i32
    %c0_i32_0 = arith.constant 0 : i32
    %c0_i32_1 = arith.constant 0 : i32
    return %c0_i32, %c0_i32_0 : i32, i32
  }
  func.func @transform_3(%arg0: i32) -> (i32, i32, i32) {
    %c0_i32 = arith.constant 0 : i32
    %c0_i32_0 = arith.constant 0 : i32
    %c0_i32_1 = arith.constant 0 : i32
    return %arg0, %c0_i32, %c0_i32_0 : i32, i32, i32
  }
}

</mosaic_0001>

<llo_original>
// kernel: tpu_custom_call.1
$region0: #{tpu_custom_call.1}
  #allocation0 [shape = 'u32[]', space=smem, size = 0x4, offset = 0x4, fixed_abs, tag = 'smem constant byte address 0x4 - core index']
  #allocation1 [shape = 'u32[144,128]{1,0:T(1,128)}', space=vmem, size = 0x12000, scoped, tag = 'internal scratch']
  %s0 = inlined_call_operand.hbm [shape: f32[2,4,256], index: 0, kind: input, shape index: {}]
  %s1 = inlined_call_operand.vmem [shape: f32[4,2], index: 1, kind: input, shape index: {}]
  %s2 = inlined_call_operand.vmem [shape: f32[4,2], index: 2, kind: input, shape index: {}]
  %s3 = inlined_call_operand.hbm [shape: f32[2,4,256], index: 3, kind: output, shape index: {}]
  %s4 = sld [smem:[#allocation0]]
  $region26: #{tpu_custom_call.1} parent=0
    _
  %s6 = ssub.s32 1, %s4
  %s7 = scalar_select 0, %s6, %s4
  $region1: #{tpu_custom_call.1} parent=0
    #allocation2 [shape = 'u8[8192]{0}', space=vmem, size = 0x2000, scoped, tag = 'input window, operand 0, single buffered']
    #allocation3 [shape = 's32[1]{0}', space=sflag, size = 0x4, scoped, tag = 'scoped memory for tpu_custom_call.1']
    #allocation4 [shape = 's32[1]{0}', space=sflag, size = 0x4, scoped, tag = 'scoped memory for tpu_custom_call.1']
    #allocation5 [shape = 'u8[8192]{0}', space=vmem, size = 0x2000, scoped, tag = 'output window, operand 0, single buffered']
    %8 = vsyncpa [#allocation3], 0
    %9 = vsyncpa [#allocation4], 0
    // Predicated region
    $region2: #{tpu_custom_call.1} parent=1 // pred_check
      _
    $region3: #{tpu_custom_call.1} parent=1 // pred_check_branch
      %11 = sbr.rel (0) target = $region5
    $region4: #{tpu_custom_call.1} parent=1 // pred_region
      %s13 = ssub.s32 256, 256
      %14 = vsyncadd [#allocation3], %s13
      %s15 = sshll.u32 [#allocation2], 4
      %s16 = int_to_ptr.vmem [resolvable:$true] %s15
      %21 = dma.hbm_to_vmem [thread:$0]  %s0, 256, %s16, [#allocation3], 128, 128, 8
    $region5: #{tpu_custom_call.1} parent=1 // pred_fallthru
      _
    // Predicated region
    $region6: #{tpu_custom_call.1} parent=1 // pred_check
      _
    $region7: #{tpu_custom_call.1} parent=1 // pred_check_branch
      %23 = sbr.rel (0) target = $region9
    $region8: #{tpu_custom_call.1} parent=1 // pred_region
      _
    $region9: #{tpu_custom_call.1} parent=1 // pred_fallthru
      _
    // Predicated region
    $region10: #{tpu_custom_call.1} parent=1 // pred_check
      _
    $region11: #{tpu_custom_call.1} parent=1 // pred_check_branch
      %25 = sbr.rel (0) target = $region13
    $region12: #{tpu_custom_call.1} parent=1 // pred_region
      _
    $region13: #{tpu_custom_call.1} parent=1 // pred_fallthru
      _
    // Predicated region
    $region14: #{tpu_custom_call.1} parent=1 // pred_check
      _
    $region15: #{tpu_custom_call.1} parent=1 // pred_check_branch
      %27 = sbr.rel (0) target = $region17
    $region16: #{tpu_custom_call.1} parent=1 // pred_region
      %28 = dma.done [#allocation3], 256
    $region17: #{tpu_custom_call.1} parent=1 // pred_fallthru
      _
    %v29 = vld [vmem:[#allocation2] sm:$0xff]
    %v30 = vld [vmem:[#allocation2 + $0x8] sm:$0xff]
    %v33 = vcombine.high %v29, %v29
    %v34 = vcombine.high %v30, %v30
    %vm37 = vcmask 1043456
    %v38 = vsel %vm37, %v29, 0.0
    %v39 = vsel %vm37, %v33, 0.0
    %v40 = vadd.f32 %v38, %v39
    %41 = vadd.xlane.f32.xlu0 %v40
    %v42 = vpop.xlane.xlu0 %41
    %v43 = vsel %vm37, %v30, 0.0
    %v44 = vsel %vm37, %v34, 0.0
    %v45 = vadd.f32 %v43, %v44
    %46 = vadd.xlane.f32.xlu0 %v45
    %v47 = vpop.xlane.xlu0 %46
    %v48 = vmul.f32 %v42, 0.00390625
    %v49 = vmul.f32 %v47, 0.00390625
    %v50 = vld [vmem:[%s1] sm:$0xf]
    %v51 = vmul.f32 %v48, %v50
    %v52 = vmul.f32 %v49, %v50
    %vm53 = vcmask 11264
    %v54 = vsel %vm53, %v51, 0.0
    %v55 = vrot.slane %v54, 4
    %v56 = vadd.f32 %v54, %v55
    %v57 = vrot.slane %v56, 2
    %v58 = vadd.f32 %v56, %v57
    %v59 = vrot.slane %v58, 1
    %v60 = vadd.f32 %v58, %v59
    %v61 = vsel %vm53, %v52, 0.0
    %v62 = vrot.slane %v61, 4
    %v63 = vadd.f32 %v61, %v62
    %v64 = vrot.slane %v63, 2
    %v65 = vadd.f32 %v63, %v64
    %v66 = vrot.slane %v65, 1
    %v67 = vadd.f32 %v65, %v66
    %v68 = vmax.f32 %v60, 0.0
    %v69 = vmax.f32 %v67, 0.0
    %v70 = vld [vmem:[%s2] sm:$0xf]
    %v71 = vmul.f32 %v68, %v70
    %v72 = vmul.f32 %v69, %v70
    %v73 = vsel %vm53, %v71, 0.0
    %74 = vadd.xlane.f32.xlu0 %v73
    %v75 = vpop.xlane.xlu0 %74
    %v76 = vsel %vm53, %v72, 0.0
    %77 = vadd.xlane.f32.xlu0 %v76
    %v78 = vpop.xlane.xlu0 %77
    %v79 = vsub.f32 0.0, %v75
    %v80 = vsub.f32 0.0, %v78
    %v81 = vmul.f32 %v79, 1.442695
    %v82 = vpow.pop %v81
    %v83 = vmul.f32 %v80, 1.442695
    %v84 = vpow.pop %v83
    %v85 = vadd.f32 %v82, 1.0
    %v86 = vadd.f32 %v84, 1.0
    %v87 = vrcp.pop %v85
    %v88 = vrcp.pop %v86
    %v92 = vunpack.c.l.s4 839922192
    %v93 = vunpack.c.0.s8 %v92
    %v94 = vlaneseq
    %v95 = vshrl.u32 %v94, 7
    %v96 = vsub.s32 %v93, %v95
    %v97 = vrot.slane %v87, %v96
    %v99 = vunpack.c.l.s4 839922192
    %v100 = vunpack.c.0.s8 %v99
    %v101 = vlaneseq
    %v102 = vshrl.u32 %v101, 7
    %v103 = vsub.s32 %v100, %v102
    %v104 = vrot.slane %v88, %v103
    %v107 = vmul.f32 %v29, %v97
    %v108 = vmul.f32 %v30, %v104
    %109 = vst [vmem:[#allocation5] sm:$0xff] %v107
    %110 = vst [vmem:[#allocation5 + $0x8] sm:$0xff] %v108
    // Predicated region
    $region18: #{tpu_custom_call.1} parent=1 // pred_check
      _
    $region19: #{tpu_custom_call.1} parent=1 // pred_check_branch
      %112 = sbr.rel (0) target = $region21
    $region20: #{tpu_custom_call.1} parent=1 // pred_region
      %s114 = ssub.s32 256, 256
      %115 = vsyncadd [#allocation4], %s114
      %s116 = sshll.u32 [#allocation5], 4
      %s117 = int_to_ptr.vmem [resolvable:$true] %s116
      %122 = dma.vmem_to_hbm [thread:$0]  %s117, 256, %s3, [#allocation4], 128, 128, 8
    $region21: #{tpu_custom_call.1} parent=1 // pred_fallthru
      _
    // Predicated region
    $region22: #{tpu_custom_call.1} parent=1 // pred_check
      _
    $region23: #{tpu_custom_call.1} parent=1 // pred_check_branch
      %124 = sbr.rel (0) target = $region25
    $region24: #{tpu_custom_call.1} parent=1 // pred_region
      %125 = dma.done [#allocation4], 256
    $region25: #{tpu_custom_call.1} parent=1 // pred_fallthru
      _
    %126 = vsyncpa [#allocation3], 1
    %127 = vsyncpa [#allocation4], 1

</llo_original>
